<compile_context>
chip_gen: v7x
topology: tpu7x:2x2x1
jax: 0.10.0
libtpu: 0.0.40
codegen_flags: <defaults>
</compile_context>

<pallas_src>
import math
import numpy as np
import jax
import jax.numpy as jnp
from jax.experimental import pallas as pl
from jax.experimental.pallas import tpu as pltpu

# ----------------------- module configuration (from __init__) ----------------
ENC_DIM = 16                                  # net.conf.enc_embed_dim (small test size)
DEC_DIM = 16                                  # net.conf.dec_embed_dim
IDIM = ENC_DIM + DEC_DIM                      # in_features of the Mlp
HIDDEN_FACTOR = 4.0
HIDDEN = int(HIDDEN_FACTOR * IDIM)            # 128
LOCAL_FEAT_DIM = 16
TWO_CONFS = True
PATCH = 2                                     # net.patch_embed.patch_size
SUBPIX = PATCH * PATCH                        # 4 sub-pixels per token
OUT_CH = LOCAL_FEAT_DIM + int(TWO_CONFS)      # 17 channels after pixel_shuffle
OUT_DIM = OUT_CH * SUBPIX                     # 68 Mlp out_features
DESC_DIM = LOCAL_FEAT_DIM * SUBPIX            # 64 desc columns per token (permuted layout)
OUT_PAD = 128                                 # lane-dense padded output width
G_ROWS = 8                                    # group-mask rows (sublane aligned; rows 4..7 unused)
DESC_CONF_MODE = ("exp", 0.0, float("inf"))   # net.conf.desc_conf_mode
DESC_MODE = "norm"                            # net.conf.desc_mode

assert DESC_CONF_MODE[0] == "exp" and not math.isfinite(DESC_CONF_MODE[2])
_CONF_VMIN = float(DESC_CONF_MODE[1])
_INV_SQRT2 = float(1.0 / np.sqrt(2.0))
_NORM_EPS = 1e-24     # guards rsqrt against an all-zero descriptor row


# ----------------------------- Pallas kernel ---------------------------------
def fused_head_kernel(enc_ref, dec_ref, w1e_ref, w1d_ref, b1_ref,
                      w2_ref, b2_ref, g_ref, out_ref):
    """fc1 -> exact GELU -> fc2 (permuted+padded) -> L2-norm desc + exp conf.

    Per token row the (tm, 128) output slab is:
      cols [0, 64)  : L2-normalized desc, sub-pixel-major (4 x 16)
      cols [64, 68) : exp confidence per sub-pixel
      cols [68,128) : padding (sliced off by the wrapper)
    """
    mm_dtype = w1e_ref.dtype                       # bf16 (v6e/v7x fast path) or f32
    xe = enc_ref[...].astype(mm_dtype)             # (tm, ENC_DIM)
    xd = dec_ref[...].astype(mm_dtype)             # (tm, DEC_DIM)

    # split-K fc1: avoids materializing concat(enc, dec) in HBM
    h = (jnp.dot(xe, w1e_ref[...], preferred_element_type=jnp.float32)
         + jnp.dot(xd, w1d_ref[...], preferred_element_type=jnp.float32)
         + b1_ref[...])                            # (tm, HIDDEN) f32
    # torch nn.GELU() default is the exact erf GELU; keep it in f32
    h = 0.5 * h * (1.0 + jax.lax.erf(h * _INV_SQRT2))

    o = jnp.dot(h.astype(mm_dtype), w2_ref[...],
                preferred_element_type=jnp.float32) + b2_ref[...]   # (tm, 128) f32

    # per-sub-pixel L2 norm over each 16-wide desc group via the group matrix G
    g = g_ref[...]                                                   # (8, 128) f32
    ss = jax.lax.dot_general(o * o, g, (((1,), (1,)), ((), ())),
                             preferred_element_type=jnp.float32)     # (tm, 8)
    inv = jax.lax.rsqrt(jnp.maximum(ss, _NORM_EPS))                  # EUP rsqrt
    scale = jnp.dot(inv, g, preferred_element_type=jnp.float32)      # (tm, 128)

    lane = jax.lax.broadcasted_iota(jnp.int32, o.shape, 1)
    # desc lanes: d * 1/||d|| ; conf (and pad) lanes: vmin + exp(x)
    # (clip(max=vmax-vmin) dropped: vmax is +inf in this config)
    out = jnp.where(lane < DESC_DIM, o * scale, _CONF_VMIN + jnp.exp(o))
    out_ref[...] = out.astype(out_ref.dtype)


# ----------------------------- wrappers ---------------------------------------
def _round_up(x, m):
    return ((x + m - 1) // m) * m


def prepare_params(w1, b1, w2, b2, matmul_dtype=jnp.bfloat16):
    """Split / permute / lane-pad the torch-layout Mlp weights for the kernel."""
    w1e = w1[:ENC_DIM].astype(matmul_dtype)
    w1d = w1[ENC_DIM:].astype(matmul_dtype)
    b1f = b1.reshape(1, HIDDEN).astype(jnp.float32)

    # fc2 column permutation: sub-pixel-major desc (4x16) then the 4 confs, so the
    # kernel output already matches the post-pixel_shuffle channel order.
    # original column for channel c, sub-pixel p is c*SUBPIX + p.
    perm = np.array(
        [c * SUBPIX + p for p in range(SUBPIX) for c in range(LOCAL_FEAT_DIM)]
        + [LOCAL_FEAT_DIM * SUBPIX + p for p in range(SUBPIX)], dtype=np.int32)
    w2p = jnp.zeros((HIDDEN, OUT_PAD), jnp.float32).at[:, :OUT_DIM].set(w2[:, perm])
    b2p = jnp.zeros((1, OUT_PAD), jnp.float32).at[:, :OUT_DIM].set(
        b2.reshape(1, OUT_DIM)[:, perm])

    # group-selection matrix: G[p, q] = 1 iff column q is a desc lane of sub-pixel p
    g = np.zeros((G_ROWS, OUT_PAD), np.float32)
    for p in range(SUBPIX):
        g[p, p * LOCAL_FEAT_DIM:(p + 1) * LOCAL_FEAT_DIM] = 1.0

    return (w1e, w1d, b1f, w2p.astype(matmul_dtype), b2p, jnp.asarray(g))


def fused_head_pallas(enc2d, dec2d, w1e, w1d, b1, w2p, b2p, g, *, tm=512):
    """Run the fused MLP + postprocess kernel on (M, ENC/DEC) token rows."""
    M = enc2d.shape[0]
    tm = min(tm, _round_up(M, 8))          # shrink tile for tiny inputs (sublane multiple)
    Mp = _round_up(M, tm)                  # cdiv-style padding instead of asserting M % tm
    if Mp != M:
        enc2d = jnp.pad(enc2d, ((0, Mp - M), (0, 0)))
        dec2d = jnp.pad(dec2d, ((0, Mp - M), (0, 0)))

    in_bytes = enc2d.dtype.itemsize
    w_bytes = sum(int(np.prod(a.shape)) * a.dtype.itemsize
                  for a in (w1e, w1d, b1, w2p, b2p, g))
    cost = pl.CostEstimate(
        flops=2 * Mp * (IDIM * HIDDEN + HIDDEN * OUT_PAD
                        + OUT_PAD * G_ROWS + G_ROWS * OUT_PAD),
        transcendentals=Mp * (HIDDEN + OUT_PAD + G_ROWS),
        bytes_accessed=Mp * IDIM * in_bytes + w_bytes + Mp * OUT_PAD * 4,
    )

    out = pl.pallas_call(
        fused_head_kernel,
        out_shape=jax.ShapeDtypeStruct((Mp, OUT_PAD), jnp.float32),
        grid=(Mp // tm,),
        in_specs=[
            pl.BlockSpec((tm, ENC_DIM), lambda i: (i, 0)),
            pl.BlockSpec((tm, DEC_DIM), lambda i: (i, 0)),
            pl.BlockSpec((ENC_DIM, HIDDEN), lambda i: (0, 0)),
            pl.BlockSpec((DEC_DIM, HIDDEN), lambda i: (0, 0)),
            pl.BlockSpec((1, HIDDEN), lambda i: (0, 0)),
            pl.BlockSpec((HIDDEN, OUT_PAD), lambda i: (0, 0)),
            pl.BlockSpec((1, OUT_PAD), lambda i: (0, 0)),
            pl.BlockSpec((G_ROWS, OUT_PAD), lambda i: (0, 0)),
        ],
        out_specs=pl.BlockSpec((tm, OUT_PAD), lambda i: (i, 0)),
        compiler_params=pltpu.CompilerParams(dimension_semantics=("parallel",)),
        cost_estimate=cost,
    )(enc2d, dec2d, w1e, w1d, b1, w2p, b2p, g)
    return out[:M] if Mp != M else out


def mlp_local_features_forward(enc_output, dec_output, params, img_shape,
                               *, matmul_dtype=jnp.bfloat16, tm=512):
    """Pallas-backed equivalent of MLP_LocalFeatures.forward (with postprocess)."""
    H, W = img_shape
    B, S, _ = enc_output.shape
    ht, wt = H // PATCH, W // PATCH
    assert S == ht * wt

    w1e, w1d, b1, w2p, b2p, g = prepare_params(*params, matmul_dtype=matmul_dtype)
    enc2d = enc_output.reshape(B * S, ENC_DIM)
    dec2d = dec_output.reshape(B * S, DEC_DIM)

    out = fused_head_pallas(enc2d, dec2d, w1e, w1d, b1, w2p, b2p, g, tm=tm)  # (B*S, 128)

    # pixel_shuffle + NHWC permute collapse to reshape/transpose glue on the
    # already sub-pixel-ordered kernel output.
    desc = out[:, :DESC_DIM].reshape(B, ht, wt, PATCH, PATCH, LOCAL_FEAT_DIM)
    desc = desc.transpose(0, 1, 3, 2, 4, 5).reshape(B, H, W, LOCAL_FEAT_DIM)
    conf = out[:, DESC_DIM:OUT_DIM].reshape(B, ht, wt, PATCH, PATCH)
    conf = conf.transpose(0, 1, 3, 2, 4).reshape(B, H, W)
    return {"desc": desc, "desc_conf": conf}


# ----------------------------- pure-JAX reference -----------------------------
def pixel_shuffle_nchw(x, ps):
    B, Cps2, h, w = x.shape
    C = Cps2 // (ps * ps)
    x = x.reshape(B, C, ps, ps, h, w)
    x = x.transpose(0, 1, 4, 2, 5, 3)
    return x.reshape(B, C, h * ps, w * ps)


def reference_forward(enc_output, dec_output, params, img_shape,
                      *, matmul_dtype=jnp.float32):
    """Straight transcription of the torch head (same matmul-operand dtype)."""
    H, W = img_shape
    B, S, _ = enc_output.shape
    w1, b1, w2, b2 = params
    x = jnp.concatenate([enc_output, dec_output], axis=-1)
    h = jnp.dot(x.astype(matmul_dtype), w1.astype(matmul_dtype),
                precision="highest", preferred_element_type=jnp.float32) + b1
    h = 0.5 * h * (1.0 + jax.scipy.special.erf(h * _INV_SQRT2))
    o = jnp.dot(h.astype(matmul_dtype), w2.astype(matmul_dtype),
                precision="highest", preferred_element_type=jnp.float32) + b2
    lf = o.transpose(0, 2, 1).reshape(B, OUT_DIM, H // PATCH, W // PATCH)
    lf = pixel_shuffle_nchw(lf, PATCH)
    fmap = lf.transpose(0, 2, 3, 1)
    d = fmap[..., :LOCAL_FEAT_DIM]
    d = d / jnp.linalg.norm(d, axis=-1, keepdims=True)
    mode, vmin, vmax = DESC_CONF_MODE
    c = jnp.exp(fmap[..., LOCAL_FEAT_DIM])
    if math.isfinite(vmax):
        c = jnp.minimum(c, vmax - vmin)
    c = vmin + c
    return {"desc": d, "desc_conf": c}


# ----------------------------- main --------------------------------------------
if __name__ == "__main__":
    def _run_case(B, Himg, Wimg, matmul_dtype, tm, tag):
        S = (Himg // PATCH) * (Wimg // PATCH)
        key = jax.random.PRNGKey(0)
        k_enc, k_dec, k_w1, k_b1, k_w2, k_b2 = jax.random.split(key, 6)

        enc_output = jax.random.normal(k_enc, (B, S, ENC_DIM), dtype=jnp.float32)
        dec_output = jax.random.normal(k_dec, (B, S, DEC_DIM), dtype=jnp.float32)

        # deterministic parameter init (shapes match nn.Linear in the Mlp head)
        w1 = jax.random.normal(k_w1, (IDIM, HIDDEN), dtype=jnp.float32) / np.sqrt(IDIM)
        b1 = jax.random.normal(k_b1, (1, HIDDEN), dtype=jnp.float32) * 0.02
        w2 = jax.random.normal(k_w2, (HIDDEN, OUT_DIM), dtype=jnp.float32) / np.sqrt(HIDDEN)
        b2 = jax.random.normal(k_b2, (1, OUT_DIM), dtype=jnp.float32) * 0.02
        params = (w1, b1, w2, b2)

        out = mlp_local_features_forward(enc_output, dec_output, params, (Himg, Wimg),
                                         matmul_dtype=matmul_dtype, tm=tm)
        out = jax.tree_util.tree_map(jax.block_until_ready, out)

        ref = reference_forward(enc_output, dec_output, params, (Himg, Wimg),
                                matmul_dtype=matmul_dtype)
        np.testing.assert_allclose(np.asarray(out["desc"]), np.asarray(ref["desc"]),
                                   rtol=2e-3, atol=2e-3, err_msg=f"{tag}: desc")
        np.testing.assert_allclose(np.asarray(out["desc_conf"]), np.asarray(ref["desc_conf"]),
                                   rtol=2e-3, atol=2e-3, err_msg=f"{tag}: desc_conf")
        assert out["desc"].shape == (B, Himg, Wimg, LOCAL_FEAT_DIM)
        assert out["desc_conf"].shape == (B, Himg, Wimg)

    # small case, f32 matmul operands (checks the fused math / column permutation)
    _run_case(B=2, Himg=8, Wimg=8, matmul_dtype=jnp.float32, tm=512, tag="f32-small")
    # bf16 MXU operands (v6e/v7x fast path) + a shape exercising row padding and grid>1
    _run_case(B=1, Himg=36, Wimg=36, matmul_dtype=jnp.bfloat16, tm=256, tag="bf16-pad")

    print("KERNEL_OK")
</pallas_src>

<mosaic_0001>
module attributes {stable_mosaic.version = 11 : i64} {
  func.func @fused_head_kernel(%arg0: i32, %arg1: memref<32x16xf32, #tpu.memory_space<vmem>>, %arg2: memref<32x16xf32, #tpu.memory_space<vmem>>, %arg3: memref<16x128xf32, #tpu.memory_space<vmem>>, %arg4: memref<16x128xf32, #tpu.memory_space<vmem>>, %arg5: memref<1x128xf32, #tpu.memory_space<vmem>>, %arg6: memref<128x128xf32, #tpu.memory_space<vmem>>, %arg7: memref<1x128xf32, #tpu.memory_space<vmem>>, %arg8: memref<8x128xf32, #tpu.memory_space<vmem>>, %arg9: memref<32x128xf32, #tpu.memory_space<vmem>>) attributes {dimension_semantics = [#tpu.dimension_semantics<parallel>], iteration_bounds = array<i64: 1>, scalar_prefetch = 0 : i64, scratch_operands = 0 : i64, tpu.core_type = #tpu.core_type<tc>, window_params = [{transform_indices = @transform_0, window_bounds = array<i64: 32, 16>}, {transform_indices = @transform_1, window_bounds = array<i64: 32, 16>}, {pipeline_mode = #tpu.pipeline_mode<synchronous>, transform_indices = @transform_2, window_bounds = array<i64: 16, 128>}, {pipeline_mode = #tpu.pipeline_mode<synchronous>, transform_indices = @transform_3, window_bounds = array<i64: 16, 128>}, {pipeline_mode = #tpu.pipeline_mode<synchronous>, transform_indices = @transform_4, window_bounds = array<i64: 1, 128>}, {pipeline_mode = #tpu.pipeline_mode<synchronous>, transform_indices = @transform_5, window_bounds = array<i64: 128, 128>}, {pipeline_mode = #tpu.pipeline_mode<synchronous>, transform_indices = @transform_6, window_bounds = array<i64: 1, 128>}, {pipeline_mode = #tpu.pipeline_mode<synchronous>, transform_indices = @transform_7, window_bounds = array<i64: 8, 128>}, {transform_indices = @transform_8, window_bounds = array<i64: 32, 128>}]} {
    %c0 = arith.constant 0 : index
    %c0_0 = arith.constant 0 : index
    %0 = vector.load %arg1[%c0, %c0_0] : memref<32x16xf32, #tpu.memory_space<vmem>>, vector<32x16xf32>
    %c0_1 = arith.constant 0 : index
    %c0_2 = arith.constant 0 : index
    %1 = vector.load %arg2[%c0_1, %c0_2] : memref<32x16xf32, #tpu.memory_space<vmem>>, vector<32x16xf32>
    %c0_3 = arith.constant 0 : index
    %c0_4 = arith.constant 0 : index
    %2 = vector.load %arg3[%c0_3, %c0_4] : memref<16x128xf32, #tpu.memory_space<vmem>>, vector<16x128xf32>
    %cst = arith.constant dense<0.000000e+00> : vector<32x128xf32>
    %3 = tpu.matmul %0, %2, %cst {dimension_numbers = #tpu.dot_dimension_numbers<[1], [0], [0], [1], [0, 0, 1, 1], [], []>} : vector<32x16xf32>, vector<16x128xf32>, vector<32x128xf32> -> vector<32x128xf32>
    %c0_5 = arith.constant 0 : index
    %c0_6 = arith.constant 0 : index
    %4 = vector.load %arg4[%c0_5, %c0_6] : memref<16x128xf32, #tpu.memory_space<vmem>>, vector<16x128xf32>
    %cst_7 = arith.constant dense<0.000000e+00> : vector<32x128xf32>
    %5 = tpu.matmul %1, %4, %cst_7 {dimension_numbers = #tpu.dot_dimension_numbers<[1], [0], [0], [1], [0, 0, 1, 1], [], []>} : vector<32x16xf32>, vector<16x128xf32>, vector<32x128xf32> -> vector<32x128xf32>
    %6 = arith.addf %3, %5 : vector<32x128xf32>
    %c0_8 = arith.constant 0 : index
    %c0_9 = arith.constant 0 : index
    %7 = vector.load %arg5[%c0_8, %c0_9] : memref<1x128xf32, #tpu.memory_space<vmem>>, vector<1x128xf32>
    %8 = vector.broadcast %7 : vector<1x128xf32> to vector<32x128xf32>
    %9 = arith.addf %6, %8 : vector<32x128xf32>
    %cst_10 = arith.constant 5.000000e-01 : f32
    %10 = vector.broadcast %cst_10 : f32 to vector<32x128xf32>
    %11 = arith.mulf %10, %9 : vector<32x128xf32>
    %cst_11 = arith.constant 0.707106769 : f32
    %12 = vector.broadcast %cst_11 : f32 to vector<32x128xf32>
    %13 = arith.mulf %9, %12 : vector<32x128xf32>
    %14 = math.erf %13 : vector<32x128xf32>
    %cst_12 = arith.constant 1.000000e+00 : f32
    %15 = vector.broadcast %cst_12 : f32 to vector<32x128xf32>
    %16 = arith.addf %15, %14 : vector<32x128xf32>
    %17 = arith.mulf %11, %16 : vector<32x128xf32>
    %c0_13 = arith.constant 0 : index
    %c0_14 = arith.constant 0 : index
    %18 = vector.load %arg6[%c0_13, %c0_14] : memref<128x128xf32, #tpu.memory_space<vmem>>, vector<128x128xf32>
    %cst_15 = arith.constant dense<0.000000e+00> : vector<32x128xf32>
    %19 = tpu.matmul %17, %18, %cst_15 {dimension_numbers = #tpu.dot_dimension_numbers<[1], [0], [0], [1], [0, 0, 1, 1], [], []>} : vector<32x128xf32>, vector<128x128xf32>, vector<32x128xf32> -> vector<32x128xf32>
    %c0_16 = arith.constant 0 : index
    %c0_17 = arith.constant 0 : index
    %20 = vector.load %arg7[%c0_16, %c0_17] : memref<1x128xf32, #tpu.memory_space<vmem>>, vector<1x128xf32>
    %21 = vector.broadcast %20 : vector<1x128xf32> to vector<32x128xf32>
    %22 = arith.addf %19, %21 : vector<32x128xf32>
    %c0_18 = arith.constant 0 : index
    %c0_19 = arith.constant 0 : index
    %23 = vector.load %arg8[%c0_18, %c0_19] : memref<8x128xf32, #tpu.memory_space<vmem>>, vector<8x128xf32>
    %24 = arith.mulf %22, %22 : vector<32x128xf32>
    %cst_20 = arith.constant dense<0.000000e+00> : vector<32x8xf32>
    %25 = tpu.matmul %24, %23, %cst_20 {dimension_numbers = #tpu.dot_dimension_numbers<[1], [1], [0], [0], [0, 0, 1, 0], [], []>} : vector<32x128xf32>, vector<8x128xf32>, vector<32x8xf32> -> vector<32x8xf32>
    %cst_21 = arith.constant 1.000000e-24 : f32
    %26 = vector.broadcast %cst_21 : f32 to vector<32x8xf32>
    %27 = arith.maximumf %25, %26 : vector<32x8xf32>
    %28 = math.rsqrt %27 : vector<32x8xf32>
    %cst_22 = arith.constant dense<0.000000e+00> : vector<32x128xf32>
    %29 = tpu.matmul %28, %23, %cst_22 {dimension_numbers = #tpu.dot_dimension_numbers<[1], [0], [0], [1], [0, 0, 1, 1], [], []>} : vector<32x8xf32>, vector<8x128xf32>, vector<32x128xf32> -> vector<32x128xf32>
    %30 = tpu.iota {dimensions = array<i32: 1>} : vector<32x128xi32>
    %c64_i32 = arith.constant 64 : i32
    %31 = vector.broadcast %c64_i32 : i32 to vector<32x128xi32>
    %32 = arith.cmpi slt, %30, %31 : vector<32x128xi32>
    %33 = arith.mulf %22, %29 : vector<32x128xf32>
    %34 = math.exp %22 : vector<32x128xf32>
    %cst_23 = arith.constant 0.000000e+00 : f32
    %35 = vector.broadcast %cst_23 : f32 to vector<32x128xf32>
    %36 = arith.addf %35, %34 : vector<32x128xf32>
    %37 = arith.select %32, %33, %36 : vector<32x128xi1>, vector<32x128xf32>
    %c0_24 = arith.constant 0 : index
    %c0_25 = arith.constant 0 : index
    %38 = vector.load %arg9[%c0_24, %c0_25] : memref<32x128xf32, #tpu.memory_space<vmem>>, vector<32x128xf32>
    tpu.vector_store %arg9[%c0_24, %c0_25], %37 {strides = array<i32>} : memref<32x128xf32, #tpu.memory_space<vmem>>, vector<32x128xf32>,
    return
  }
  func.func @transform_0(%arg0: i32) -> (i32, i32) {
    %c0_i32 = arith.constant 0 : i32
    %c0_i32_0 = arith.constant 0 : i32
    return %arg0, %c0_i32 : i32, i32
  }
  func.func @transform_1(%arg0: i32) -> (i32, i32) {
    %c0_i32 = arith.constant 0 : i32
    %c0_i32_0 = arith.constant 0 : i32
    return %arg0, %c0_i32 : i32, i32
  }
  func.func @transform_2(%arg0: i32) -> (i32, i32) {
    %c0_i32 = arith.constant 0 : i32
    %c0_i32_0 = arith.constant 0 : i32
    %c0_i32_1 = arith.constant 0 : i32
    return %c0_i32, %c0_i32_0 : i32, i32
  }
  func.func @transform_3(%arg0: i32) -> (i32, i32) {
    %c0_i32 = arith.constant 0 : i32
    %c0_i32_0 = arith.constant 0 : i32
    %c0_i32_1 = arith.constant 0 : i32
    return %c0_i32, %c0_i32_0 : i32, i32
  }
  func.func @transform_4(%arg0: i32) -> (i32, i32) {
    %c0_i32 = arith.constant 0 : i32
    %c0_i32_0 = arith.constant 0 : i32
    %c0_i32_1 = arith.constant 0 : i32
    return %c0_i32, %c0_i32_0 : i32, i32
  }
  func.func @transform_5(%arg0: i32) -> (i32, i32) {
    %c0_i32 = arith.constant 0 : i32
    %c0_i32_0 = arith.constant 0 : i32
    %c0_i32_1 = arith.constant 0 : i32
    return %c0_i32, %c0_i32_0 : i32, i32
  }
  func.func @transform_6(%arg0: i32) -> (i32, i32) {
    %c0_i32 = arith.constant 0 : i32
    %c0_i32_0 = arith.constant 0 : i32
    %c0_i32_1 = arith.constant 0 : i32
    return %c0_i32, %c0_i32_0 : i32, i32
  }
  func.func @transform_7(%arg0: i32) -> (i32, i32) {
    %c0_i32 = arith.constant 0 : i32
    %c0_i32_0 = arith.constant 0 : i32
    %c0_i32_1 = arith.constant 0 : i32
    return %c0_i32, %c0_i32_0 : i32, i32
  }
  func.func @transform_8(%arg0: i32) -> (i32, i32) {
    %c0_i32 = arith.constant 0 : i32
    %c0_i32_0 = arith.constant 0 : i32
    return %arg0, %c0_i32 : i32, i32
  }
}

</mosaic_0001>

<llo_original>
// kernel: tpu_custom_call.1
$region0: #{tpu_custom_call.1}
  #allocation0 [shape = 'u32[]', space=smem, size = 0x4, offset = 0x4, fixed_abs, tag = 'smem constant byte address 0x4 - core index']
  #allocation1 [shape = 'u32[144,128]{1,0:T(1,128)}', space=vmem, size = 0x12000, scoped, tag = 'internal scratch']
  %s0 = inlined_call_operand.vmem [shape: f32[32,16], index: 0, kind: input, shape index: {}]
  %s1 = inlined_call_operand.vmem [shape: f32[32,16], index: 1, kind: input, shape index: {}]
  %s2 = inlined_call_operand.vmem [shape: f32[16,128], index: 2, kind: input, shape index: {}]
  %s3 = inlined_call_operand.vmem [shape: f32[16,128], index: 3, kind: input, shape index: {}]
  %s4 = inlined_call_operand.vmem [shape: f32[1,128], index: 4, kind: input, shape index: {}]
  %s5 = inlined_call_operand.hbm [shape: f32[128,128], index: 5, kind: input, shape index: {}]
  %s6 = inlined_call_operand.vmem [shape: f32[1,128], index: 6, kind: input, shape index: {}]
  %s7 = inlined_call_operand.vmem [shape: f32[8,128], index: 7, kind: input, shape index: {}]
  %s8 = inlined_call_operand.hbm [shape: f32[32,128], index: 8, kind: output, shape index: {}]
  %s9 = sld [smem:[#allocation0]]
  $region46: #{tpu_custom_call.1} parent=0
    _
  %s11 = ssub.s32 1, %s9
  %s12 = scalar_select 0, %s11, %s9
  $region1: #{tpu_custom_call.1} parent=0
    #allocation2 [shape = 'u8[65536]{0}', space=vmem, size = 0x10000, scoped, tag = 'input window, operand 5, single buffered']
    #allocation3 [shape = 's32[1]{0}', space=sflag, size = 0x4, scoped, tag = 'scoped memory for tpu_custom_call.1']
    #allocation4 [shape = 's32[1]{0}', space=sflag, size = 0x4, scoped, tag = 'scoped memory for tpu_custom_call.1']
    #allocation5 [shape = 'u8[16384]{0}', space=vmem, size = 0x4000, scoped, tag = 'output window, operand 0, single buffered']
    %13 = vsyncpa [#allocation3], 0
    %14 = vsyncpa [#allocation4], 0
    // Predicated region
    $region2: #{tpu_custom_call.1} parent=1 // pred_check
      _
    $region3: #{tpu_custom_call.1} parent=1 // pred_check_branch
      %16 = sbr.rel (0) target = $region5
    $region4: #{tpu_custom_call.1} parent=1 // pred_region
      _
    $region5: #{tpu_custom_call.1} parent=1 // pred_fallthru
      _
    // Predicated region
    $region6: #{tpu_custom_call.1} parent=1 // pred_check
      _
    $region7: #{tpu_custom_call.1} parent=1 // pred_check_branch
      %18 = sbr.rel (0) target = $region9
    $region8: #{tpu_custom_call.1} parent=1 // pred_region
      _
    $region9: #{tpu_custom_call.1} parent=1 // pred_fallthru
      _
    // Predicated region
    $region10: #{tpu_custom_call.1} parent=1 // pred_check
      _
    $region11: #{tpu_custom_call.1} parent=1 // pred_check_branch
      %20 = sbr.rel (0) target = $region13
    $region12: #{tpu_custom_call.1} parent=1 // pred_region
      _
    $region13: #{tpu_custom_call.1} parent=1 // pred_fallthru
      _
    // Predicated region
    $region14: #{tpu_custom_call.1} parent=1 // pred_check
      _
    $region15: #{tpu_custom_call.1} parent=1 // pred_check_branch
      %22 = sbr.rel (0) target = $region17
    $region16: #{tpu_custom_call.1} parent=1 // pred_region
      _
    $region17: #{tpu_custom_call.1} parent=1 // pred_fallthru
      _
    // Predicated region
    $region18: #{tpu_custom_call.1} parent=1 // pred_check
      _
    $region19: #{tpu_custom_call.1} parent=1 // pred_check_branch
      %24 = sbr.rel (0) target = $region21
    $region20: #{tpu_custom_call.1} parent=1 // pred_region
      _
    $region21: #{tpu_custom_call.1} parent=1 // pred_fallthru
      _
    // Predicated region
    $region22: #{tpu_custom_call.1} parent=1 // pred_check
      _
    $region23: #{tpu_custom_call.1} parent=1 // pred_check_branch
      %26 = sbr.rel (0) target = $region25
    $region24: #{tpu_custom_call.1} parent=1 // pred_region
      %s28 = ssub.s32 2048, 2048
      %29 = vsyncadd [#allocation3], %s28
      %s30 = sshll.u32 [#allocation2], 4
      %s31 = int_to_ptr.vmem [resolvable:$true] %s30
      %36 = dma.hbm_to_vmem [thread:$0]  %s5, 2048, %s31, [#allocation3], 128, 128, 8
    $region25: #{tpu_custom_call.1} parent=1 // pred_fallthru
      _
    // Predicated region
    $region26: #{tpu_custom_call.1} parent=1 // pred_check
      _
    $region27: #{tpu_custom_call.1} parent=1 // pred_check_branch
      %38 = sbr.rel (0) target = $region29
    $region28: #{tpu_custom_call.1} parent=1 // pred_region
      _
    $region29: #{tpu_custom_call.1} parent=1 // pred_fallthru
      _
    // Predicated region
    $region30: #{tpu_custom_call.1} parent=1 // pred_check
      _
    $region31: #{tpu_custom_call.1} parent=1 // pred_check_branch
      %40 = sbr.rel (0) target = $region33
    $region32: #{tpu_custom_call.1} parent=1 // pred_region
      _
    $region33: #{tpu_custom_call.1} parent=1 // pred_fallthru
      _
    // Predicated region
    $region34: #{tpu_custom_call.1} parent=1 // pred_check
      _
    $region35: #{tpu_custom_call.1} parent=1 // pred_check_branch
      %42 = sbr.rel (0) target = $region37
    $region36: #{tpu_custom_call.1} parent=1 // pred_region
      %43 = dma.done [#allocation3], 2048
    $region37: #{tpu_custom_call.1} parent=1 // pred_fallthru
      _
    %v44 = vld [vmem:[%s0] sm:$0xff]
    %v45 = vld [vmem:[%s0 + $0x8] sm:$0xff]
    %v46 = vld [vmem:[%s0 + $0x10] sm:$0xff]
    %v47 = vld [vmem:[%s0 + $0x18] sm:$0xff]
    %v48 = vld [vmem:[%s1] sm:$0xff]
    %v49 = vld [vmem:[%s1 + $0x8] sm:$0xff]
    %v50 = vld [vmem:[%s1 + $0x10] sm:$0xff]
    %v51 = vld [vmem:[%s1 + $0x18] sm:$0xff]
    %v52 = vld [vmem:[%s2] sm:$0xff]
    %v53 = vld [vmem:[%s2 + $0x8] sm:$0xff]
    %v54 = vld [vmem:[%s3] sm:$0xff]
    %v55 = vld [vmem:[%s3 + $0x8] sm:$0xff]
    %vm56 = vcmask 130048
    %v58 = vsel %vm56, %v48, 0
    %v61 = vsel %vm56, %v49, 0
    %v64 = vsel %vm56, %v50, 0
    %v67 = vsel %vm56, %v51, 0
    %69 = vmatprep.subr.mxu0 0.0
    %70 = vmatpush1.msra.mxu0 %v54
    %71 = vmatprep.subr.mxu0 0.0
    %72 = vmatpush1.msra.mxu0 %v55
    %73 = vmatprep.subr.mxu0 0.0
    %74 = vmatpush1.msra.mxu0 0.0
    %75 = vmatprep.subr.mxu0 0.0
    %76 = vmatpush1.msra.mxu0 0.0
    %77 = vmatprep.subr.mxu0 0.0
    %78 = vmatpush1.msra.mxu0 0.0
    %79 = vmatprep.subr.mxu0 0.0
    %80 = vmatpush1.msra.mxu0 0.0
    %81 = vmatprep.subr.mxu0 0.0
    %82 = vmatpush1.msra.mxu0 0.0
    %83 = vmatprep.subr.mxu0 0.0
    %84 = vmatpush1.msra.mxu0 0.0
    %85 = vmatprep.subr.mxu0 0.0
    %86 = vmatpush1.msra.mxu0 0.0
    %87 = vmatprep.subr.mxu0 0.0
    %88 = vmatpush1.msra.mxu0 0.0
    %89 = vmatprep.subr.mxu0 0.0
    %90 = vmatpush1.msra.mxu0 0.0
    %91 = vmatprep.subr.mxu0 0.0
    %92 = vmatpush1.msra.mxu0 0.0
    %93 = vmatprep.subr.mxu0 0.0
    %94 = vmatpush1.msra.mxu0 0.0
    %95 = vmatprep.subr.mxu0 0.0
    %96 = vmatpush1.msra.mxu0 0.0
    %97 = vmatprep.subr.mxu0 0.0
    %98 = vmatpush1.msra.mxu0 0.0
    %99 = vmatprep.subr.mxu0 0.0
    %100 = vmatpush1.msra.mxu0 0.0
    %101 = vmatprep.subr.mxu0 0.0
    %102 = vmatpush1.msra.mxu0 0.0
    %103 = vmatprep.subr.mxu0 0.0
    %104 = vmatpush1.msra.mxu0 0.0
    %105 = vmatprep.subr.mxu0 0.0
    %106 = vmatpush1.msra.mxu0 0.0
    %107 = vmatprep.subr.mxu0 0.0
    %108 = vmatpush1.msra.mxu0 0.0
    %109 = vmatprep.subr.mxu0 0.0
    %110 = vmatpush1.msra.mxu0 0.0
    %111 = vmatprep.subr.mxu0 0.0
    %112 = vmatpush1.msra.mxu0 0.0
    %113 = vmatprep.subr.mxu0 0.0
    %114 = vmatpush1.msra.mxu0 0.0
    %115 = vmatprep.subr.mxu0 0.0
    %116 = vmatpush1.msra.mxu0 0.0
    %117 = vmatprep.subr.mxu0 0.0
    %118 = vmatpush1.msra.mxu0 0.0
    %119 = vmatprep.subr.mxu0 0.0
    %120 = vmatpush1.msra.mxu0 0.0
    %121 = vmatprep.subr.mxu0 0.0
    %122 = vmatpush1.msra.mxu0 0.0
    %123 = vmatprep.subr.mxu0 0.0
    %124 = vmatpush1.msra.mxu0 0.0
    %125 = vmatprep.subr.mxu0 0.0
    %126 = vmatpush1.msra.mxu0 0.0
    %127 = vmatprep.subr.mxu0 0.0
    %128 = vmatpush1.msra.mxu0 0.0
    %129 = vmatprep.subr.mxu0 0.0
    %130 = vmatpush1.msra.mxu0 0.0
    %131 = vmatprep.subr.mxu0 0.0
    %132 = vmatpush1.msra.mxu0 0.0
    %133 = vmatprep.mubr.f32.mxu0 0.0
    %134 = vmatmul.mubr.f32.gmra.mrb[0].mxu0 %v58
    %v135 = vpop.f32.mrb[0].mxu0
    %v136 = vadd.f32 0.0, %v135
    %v137 = vpop.f32.mrb[0].mxu0
    %138 = vmatprep.mubr.f32.mxu0 0.0
    %139 = vmatmul.mubr.f32.gmra.mrb[0].mxu0 %v61
    %v140 = vpop.f32.mrb[0].mxu0
    %v141 = vadd.f32 0.0, %v140
    %v142 = vpop.f32.mrb[0].mxu0
    %143 = vmatprep.mubr.f32.mxu0 0.0
    %144 = vmatmul.mubr.f32.gmra.mrb[0].mxu0 %v64
    %v145 = vpop.f32.mrb[0].mxu0
    %v146 = vadd.f32 0.0, %v145
    %v147 = vpop.f32.mrb[0].mxu0
    %148 = vmatprep.mubr.f32.mxu0 0.0
    %149 = vmatmul.mubr.f32.gmra.mrb[0].mxu0 %v67
    %v150 = vpop.f32.mrb[0].mxu0
    %v151 = vadd.f32 0.0, %v150
    %v152 = vpop.f32.mrb[0].mxu0
    %153 = vdwg.mxu0
    %v155 = vsel %vm56, %v44, 0
    %v158 = vsel %vm56, %v45, 0
    %v161 = vsel %vm56, %v46, 0
    %v164 = vsel %vm56, %v47, 0
    %166 = vmatprep.subr.mxu0 0.0
    %167 = vmatpush1.msra.mxu0 %v52
    %168 = vmatprep.subr.mxu0 0.0
    %169 = vmatpush1.msra.mxu0 %v53
    %170 = vmatprep.subr.mxu0 0.0
    %171 = vmatpush1.msra.mxu0 0.0
    %172 = vmatprep.subr.mxu0 0.0
    %173 = vmatpush1.msra.mxu0 0.0
    %174 = vmatprep.subr.mxu0 0.0
    %175 = vmatpush1.msra.mxu0 0.0
    %176 = vmatprep.subr.mxu0 0.0
    %177 = vmatpush1.msra.mxu0 0.0
    %178 = vmatprep.subr.mxu0 0.0
    %179 = vmatpush1.msra.mxu0 0.0
    %180 = vmatprep.subr.mxu0 0.0
    %181 = vmatpush1.msra.mxu0 0.0
    %182 = vmatprep.subr.mxu0 0.0
    %183 = vmatpush1.msra.mxu0 0.0
    %184 = vmatprep.subr.mxu0 0.0
    %185 = vmatpush1.msra.mxu0 0.0
    %186 = vmatprep.subr.mxu0 0.0
    %187 = vmatpush1.msra.mxu0 0.0
    %188 = vmatprep.subr.mxu0 0.0
    %189 = vmatpush1.msra.mxu0 0.0
    %190 = vmatprep.subr.mxu0 0.0
    %191 = vmatpush1.msra.mxu0 0.0
    %192 = vmatprep.subr.mxu0 0.0
    %193 = vmatpush1.msra.mxu0 0.0
    %194 = vmatprep.subr.mxu0 0.0
    %195 = vmatpush1.msra.mxu0 0.0
    %196 = vmatprep.subr.mxu0 0.0
    %197 = vmatpush1.msra.mxu0 0.0
    %198 = vmatprep.subr.mxu0 0.0
    %199 = vmatpush1.msra.mxu0 0.0
    %200 = vmatprep.subr.mxu0 0.0
    %201 = vmatpush1.msra.mxu0 0.0
    %202 = vmatprep.subr.mxu0 0.0
    %203 = vmatpush1.msra.mxu0 0.0
    %204 = vmatprep.subr.mxu0 0.0
    %205 = vmatpush1.msra.mxu0 0.0
    %206 = vmatprep.subr.mxu0 0.0
    %207 = vmatpush1.msra.mxu0 0.0
    %208 = vmatprep.subr.mxu0 0.0
    %209 = vmatpush1.msra.mxu0 0.0
    %210 = vmatprep.subr.mxu0 0.0
    %211 = vmatpush1.msra.mxu0 0.0
    %212 = vmatprep.subr.mxu0 0.0
    %213 = vmatpush1.msra.mxu0 0.0
    %214 = vmatprep.subr.mxu0 0.0
    %215 = vmatpush1.msra.mxu0 0.0
    %216 = vmatprep.subr.mxu0 0.0
    %217 = vmatpush1.msra.mxu0 0.0
    %218 = vmatprep.subr.mxu0 0.0
    %219 = vmatpush1.msra.mxu0 0.0
    %220 = vmatprep.subr.mxu0 0.0
    %221 = vmatpush1.msra.mxu0 0.0
    %222 = vmatprep.subr.mxu0 0.0
    %223 = vmatpush1.msra.mxu0 0.0
    %224 = vmatprep.subr.mxu0 0.0
    %225 = vmatpush1.msra.mxu0 0.0
    %226 = vmatprep.subr.mxu0 0.0
    %227 = vmatpush1.msra.mxu0 0.0
    %228 = vmatprep.subr.mxu0 0.0
    %229 = vmatpush1.msra.mxu0 0.0
    %230 = vmatprep.mubr.f32.mxu0 0.0
    %231 = vmatmul.mubr.f32.gmra.mrb[0].mxu0 %v155
    %v232 = vpop.f32.mrb[0].mxu0
    %v233 = vadd.f32 %v136, %v232
    %v234 = vpop.f32.mrb[0].mxu0
    %235 = vmatprep.mubr.f32.mxu0 0.0
    %236 = vmatmul.mubr.f32.gmra.mrb[0].mxu0 %v158
    %v237 = vpop.f32.mrb[0].mxu0
    %v238 = vadd.f32 %v141, %v237
    %v239 = vpop.f32.mrb[0].mxu0
    %240 = vmatprep.mubr.f32.mxu0 0.0
    %241 = vmatmul.mubr.f32.gmra.mrb[0].mxu0 %v161
    %v242 = vpop.f32.mrb[0].mxu0
    %v243 = vadd.f32 %v146, %v242
    %v244 = vpop.f32.mrb[0].mxu0
    %245 = vmatprep.mubr.f32.mxu0 0.0
    %246 = vmatmul.mubr.f32.gmra.mrb[0].mxu0 %v164
    %v247 = vpop.f32.mrb[0].mxu0
    %v248 = vadd.f32 %v151, %v247
    %v249 = vpop.f32.mrb[0].mxu0
    %250 = vdwg.mxu0
    %v251 = vld [vmem:[%s4] sm:$0x1]
    %v253 = vlaneseq
    %v254 = vshrl.u32 %v253, 7
    %v255 = vsub.s32 0, %v254
    %v256 = vrot.slane %v251, %v255
    %v258 = vadd.f32 %v233, %v256
    %v259 = vadd.f32 %v238, %v256
    %v260 = vadd.f32 %v243, %v256
    %v261 = vadd.f32 %v248, %v256
    %v262 = vmul.f32 %v258, 0.5
    %v263 = vmul.f32 %v259, 0.5
    %v264 = vmul.f32 %v260, 0.5
    %v265 = vmul.f32 %v261, 0.5
    %v266 = vmul.f32 %v258, 0.70710677
    %v267 = vmul.f32 %v259, 0.70710677
    %v268 = vmul.f32 %v260, 0.70710677
    %v269 = vmul.f32 %v261, 0.70710677
    %v270 = verf.f32.pop %v266
    %v271 = verf.f32.pop %v267
    %v272 = verf.f32.pop %v268
    %v273 = verf.f32.pop %v269
    %v274 = vadd.f32 %v270, 1.0
    %v275 = vadd.f32 %v271, 1.0
    %v276 = vadd.f32 %v272, 1.0
    %v277 = vadd.f32 %v273, 1.0
    %v278 = vmul.f32 %v262, %v274
    %v279 = vmul.f32 %v263, %v275
    %v280 = vmul.f32 %v264, %v276
    %v281 = vmul.f32 %v265, %v277
    %v282 = vld [vmem:[#allocation2] sm:$0xff]
    %v283 = vld [vmem:[#allocation2 + $0x8] sm:$0xff]
    %v284 = vld [vmem:[#allocation2 + $0x10] sm:$0xff]
    %v285 = vld [vmem:[#allocation2 + $0x18] sm:$0xff]
    %v286 = vld [vmem:[#allocation2 + $0x20] sm:$0xff]
    %v287 = vld [vmem:[#allocation2 + $0x28] sm:$0xff]
    %v288 = vld [vmem:[#allocation2 + $0x30] sm:$0xff]
    %v289 = vld [vmem:[#allocation2 + $0x38] sm:$0xff]
    %v290 = vld [vmem:[#allocation2 + $0x40] sm:$0xff]
    %v291 = vld [vmem:[#allocation2 + $0x48] sm:$0xff]
    %v292 = vld [vmem:[#allocation2 + $0x50] sm:$0xff]
    %v293 = vld [vmem:[#allocation2 + $0x58] sm:$0xff]
    %v294 = vld [vmem:[#allocation2 + $0x60] sm:$0xff]
    %v295 = vld [vmem:[#allocation2 + $0x68] sm:$0xff]
    %v296 = vld [vmem:[#allocation2 + $0x70] sm:$0xff]
    %v297 = vld [vmem:[#allocation2 + $0x78] sm:$0xff]
    %v298 = vld [vmem:[%s6] sm:$0x1]
    %v300 = vlaneseq
    %v301 = vshrl.u32 %v300, 7
    %v302 = vsub.s32 0, %v301
    %v303 = vrot.slane %v298, %v302
    %305 = vmatprep.subr.mxu0 0.0
    %306 = vmatpush1.msra.mxu0 %v282
    %307 = vmatprep.subr.mxu0 0.0
    %308 = vmatpush1.msra.mxu0 %v283
    %309 = vmatprep.subr.mxu0 0.0
    %310 = vmatpush1.msra.mxu0 %v284
    %311 = vmatprep.subr.mxu0 0.0
    %312 = vmatpush1.msra.mxu0 %v285
    %313 = vmatprep.subr.mxu0 0.0
    %314 = vmatpush1.msra.mxu0 %v286
    %315 = vmatprep.subr.mxu0 0.0
    %316 = vmatpush1.msra.mxu0 %v287
    %317 = vmatprep.subr.mxu0 0.0
    %318 = vmatpush1.msra.mxu0 %v288
    %319 = vmatprep.subr.mxu0 0.0
    %320 = vmatpush1.msra.mxu0 %v289
    %321 = vmatprep.subr.mxu0 0.0
    %322 = vmatpush1.msra.mxu0 %v290
    %323 = vmatprep.subr.mxu0 0.0
    %324 = vmatpush1.msra.mxu0 %v291
    %325 = vmatprep.subr.mxu0 0.0
    %326 = vmatpush1.msra.mxu0 %v292
    %327 = vmatprep.subr.mxu0 0.0
    %328 = vmatpush1.msra.mxu0 %v293
    %329 = vmatprep.subr.mxu0 0.0
    %330 = vmatpush1.msra.mxu0 %v294
    %331 = vmatprep.subr.mxu0 0.0
    %332 = vmatpush1.msra.mxu0 %v295
    %333 = vmatprep.subr.mxu0 0.0
    %334 = vmatpush1.msra.mxu0 %v296
    %335 = vmatprep.subr.mxu0 0.0
    %336 = vmatpush1.msra.mxu0 %v297
    %337 = vmatprep.subr.mxu0 0.0
    %338 = vmatpush1.msra.mxu0 0.0
    %339 = vmatprep.subr.mxu0 0.0
    %340 = vmatpush1.msra.mxu0 0.0
    %341 = vmatprep.subr.mxu0 0.0
    %342 = vmatpush1.msra.mxu0 0.0
    %343 = vmatprep.subr.mxu0 0.0
    %344 = vmatpush1.msra.mxu0 0.0
    %345 = vmatprep.subr.mxu0 0.0
    %346 = vmatpush1.msra.mxu0 0.0
    %347 = vmatprep.subr.mxu0 0.0
    %348 = vmatpush1.msra.mxu0 0.0
    %349 = vmatprep.subr.mxu0 0.0
    %350 = vmatpush1.msra.mxu0 0.0
    %351 = vmatprep.subr.mxu0 0.0
    %352 = vmatpush1.msra.mxu0 0.0
    %353 = vmatprep.subr.mxu0 0.0
    %354 = vmatpush1.msra.mxu0 0.0
    %355 = vmatprep.subr.mxu0 0.0
    %356 = vmatpush1.msra.mxu0 0.0
    %357 = vmatprep.subr.mxu0 0.0
    %358 = vmatpush1.msra.mxu0 0.0
    %359 = vmatprep.subr.mxu0 0.0
    %360 = vmatpush1.msra.mxu0 0.0
    %361 = vmatprep.subr.mxu0 0.0
    %362 = vmatpush1.msra.mxu0 0.0
    %363 = vmatprep.subr.mxu0 0.0
    %364 = vmatpush1.msra.mxu0 0.0
    %365 = vmatprep.subr.mxu0 0.0
    %366 = vmatpush1.msra.mxu0 0.0
    %367 = vmatprep.subr.mxu0 0.0
    %368 = vmatpush1.msra.mxu0 0.0
    %369 = vmatprep.mubr.f32.mxu0 0.0
    %370 = vmatmul.mubr.f32.gmra.mrb[0].mxu0 %v278
    %v371 = vpop.f32.mrb[0].mxu0
    %v372 = vadd.f32 %v303, %v371
    %v373 = vpop.f32.mrb[0].mxu0
    %374 = vmatprep.mubr.f32.mxu0 0.0
    %375 = vmatmul.mubr.f32.gmra.mrb[0].mxu0 %v279
    %v376 = vpop.f32.mrb[0].mxu0
    %v377 = vadd.f32 %v303, %v376
    %v378 = vpop.f32.mrb[0].mxu0
    %379 = vmatprep.mubr.f32.mxu0 0.0
    %380 = vmatmul.mubr.f32.gmra.mrb[0].mxu0 %v280
    %v381 = vpop.f32.mrb[0].mxu0
    %v382 = vadd.f32 %v303, %v381
    %v383 = vpop.f32.mrb[0].mxu0
    %384 = vmatprep.mubr.f32.mxu0 0.0
    %385 = vmatmul.mubr.f32.gmra.mrb[0].mxu0 %v281
    %v386 = vpop.f32.mrb[0].mxu0
    %v387 = vadd.f32 %v303, %v386
    %v388 = vpop.f32.mrb[0].mxu0
    %389 = vdwg.mxu0
    %v390 = vld [vmem:[%s7] sm:$0xff]
    %v391 = vmul.f32 %v372, %v372
    %v392 = vmul.f32 %v377, %v377
    %v393 = vmul.f32 %v382, %v382
    %v394 = vmul.f32 %v387, %v387
    %395 = vmatprep.subr.mxu0 0.0
    %396 = vmatpush1.xpose.msra.mxu0 %v390
    %397 = vmatprep.subr.mxu0 0.0
    %398 = vmatpush1.xpose.msra.mxu0 0.0
    %399 = vmatprep.subr.mxu0 0.0
    %400 = vmatpush1.xpose.msra.mxu0 0.0
    %401 = vmatprep.subr.mxu0 0.0
    %402 = vmatpush1.xpose.msra.mxu0 0.0
    %403 = vmatprep.subr.mxu0 0.0
    %404 = vmatpush1.xpose.msra.mxu0 0.0
    %405 = vmatprep.subr.mxu0 0.0
    %406 = vmatpush1.xpose.msra.mxu0 0.0
    %407 = vmatprep.subr.mxu0 0.0
    %408 = vmatpush1.xpose.msra.mxu0 0.0
    %409 = vmatprep.subr.mxu0 0.0
    %410 = vmatpush1.xpose.msra.mxu0 0.0
    %411 = vmatprep.subr.mxu0 0.0
    %412 = vmatpush1.xpose.msra.mxu0 0.0
    %413 = vmatprep.subr.mxu0 0.0
    %414 = vmatpush1.xpose.msra.mxu0 0.0
    %415 = vmatprep.subr.mxu0 0.0
    %416 = vmatpush1.xpose.msra.mxu0 0.0
    %417 = vmatprep.subr.mxu0 0.0
    %418 = vmatpush1.xpose.msra.mxu0 0.0
    %419 = vmatprep.subr.mxu0 0.0
    %420 = vmatpush1.xpose.msra.mxu0 0.0
    %421 = vmatprep.subr.mxu0 0.0
    %422 = vmatpush1.xpose.msra.mxu0 0.0
    %423 = vmatprep.subr.mxu0 0.0
    %424 = vmatpush1.xpose.msra.mxu0 0.0
    %425 = vmatprep.subr.mxu0 0.0
    %426 = vmatpush1.xpose.msra.mxu0 0.0
    %427 = vmatprep.subr.mxu0 0.0
    %428 = vmatpush1.xpose.msra.mxu0 0.0
    %429 = vmatprep.subr.mxu0 0.0
    %430 = vmatpush1.xpose.msra.mxu0 0.0
    %431 = vmatprep.subr.mxu0 0.0
    %432 = vmatpush1.xpose.msra.mxu0 0.0
    %433 = vmatprep.subr.mxu0 0.0
    %434 = vmatpush1.xpose.msra.mxu0 0.0
    %435 = vmatprep.subr.mxu0 0.0
    %436 = vmatpush1.xpose.msra.mxu0 0.0
    %437 = vmatprep.subr.mxu0 0.0
    %438 = vmatpush1.xpose.msra.mxu0 0.0
    %439 = vmatprep.subr.mxu0 0.0
    %440 = vmatpush1.xpose.msra.mxu0 0.0
    %441 = vmatprep.subr.mxu0 0.0
    %442 = vmatpush1.xpose.msra.mxu0 0.0
    %443 = vmatprep.subr.mxu0 0.0
    %444 = vmatpush1.xpose.msra.mxu0 0.0
    %445 = vmatprep.subr.mxu0 0.0
    %446 = vmatpush1.xpose.msra.mxu0 0.0
    %447 = vmatprep.subr.mxu0 0.0
    %448 = vmatpush1.xpose.msra.mxu0 0.0
    %449 = vmatprep.subr.mxu0 0.0
    %450 = vmatpush1.xpose.msra.mxu0 0.0
    %451 = vmatprep.subr.mxu0 0.0
    %452 = vmatpush1.xpose.msra.mxu0 0.0
    %453 = vmatprep.subr.mxu0 0.0
    %454 = vmatpush1.xpose.msra.mxu0 0.0
    %455 = vmatprep.subr.mxu0 0.0
    %456 = vmatpush1.xpose.msra.mxu0 0.0
    %457 = vmatprep.subr.mxu0 0.0
    %458 = vmatpush1.xpose.msra.mxu0 0.0
    %459 = vmatprep.mubr.f32.mxu0 0.0
    %460 = vmatmul.mubr.f32.gmra.mrb[0].mxu0 %v391
    %v461 = vpop.f32.mrb[0].mxu0
    %v462 = vadd.f32 0.0, %v461
    %v463 = vpop.f32.mrb[0].mxu0
    %464 = vmatprep.mubr.f32.mxu0 0.0
    %465 = vmatmul.mubr.f32.gmra.mrb[0].mxu0 %v392
    %v466 = vpop.f32.mrb[0].mxu0
    %v467 = vadd.f32 0.0, %v466
    %v468 = vpop.f32.mrb[0].mxu0
    %469 = vmatprep.mubr.f32.mxu0 0.0
    %470 = vmatmul.mubr.f32.gmra.mrb[0].mxu0 %v393
    %v471 = vpop.f32.mrb[0].mxu0
    %v472 = vadd.f32 0.0, %v471
    %v473 = vpop.f32.mrb[0].mxu0
    %474 = vmatprep.mubr.f32.mxu0 0.0
    %475 = vmatmul.mubr.f32.gmra.mrb[0].mxu0 %v394
    %v476 = vpop.f32.mrb[0].mxu0
    %v477 = vadd.f32 0.0, %v476
    %v478 = vpop.f32.mrb[0].mxu0
    %479 = vdwg.mxu0
    %v480 = vmax.f32 %v462, 1e-24
    %v481 = vmax.f32 %v467, 1e-24
    %v482 = vmax.f32 %v472, 1e-24
    %v483 = vmax.f32 %v477, 1e-24
    %v484 = vrsqrt.pop %v480
    %v485 = vrsqrt.pop %v481
    %v486 = vrsqrt.pop %v482
    %v487 = vrsqrt.pop %v483
    %vm488 = vcmask 64512
    %v490 = vsel %vm488, %v484, 0
    %v493 = vsel %vm488, %v485, 0
    %v496 = vsel %vm488, %v486, 0
    %v499 = vsel %vm488, %v487, 0
    %501 = vmatprep.subr.mxu0 0.0
    %502 = vmatpush1.msra.mxu0 %v390
    %503 = vmatprep.subr.mxu0 0.0
    %504 = vmatpush1.msra.mxu0 0.0
    %505 = vmatprep.subr.mxu0 0.0
    %506 = vmatpush1.msra.mxu0 0.0
    %507 = vmatprep.subr.mxu0 0.0
    %508 = vmatpush1.msra.mxu0 0.0
    %509 = vmatprep.subr.mxu0 0.0
    %510 = vmatpush1.msra.mxu0 0.0
    %511 = vmatprep.subr.mxu0 0.0
    %512 = vmatpush1.msra.mxu0 0.0
    %513 = vmatprep.subr.mxu0 0.0
    %514 = vmatpush1.msra.mxu0 0.0
    %515 = vmatprep.subr.mxu0 0.0
    %516 = vmatpush1.msra.mxu0 0.0
    %517 = vmatprep.subr.mxu0 0.0
    %518 = vmatpush1.msra.mxu0 0.0
    %519 = vmatprep.subr.mxu0 0.0
    %520 = vmatpush1.msra.mxu0 0.0
    %521 = vmatprep.subr.mxu0 0.0
    %522 = vmatpush1.msra.mxu0 0.0
    %523 = vmatprep.subr.mxu0 0.0
    %524 = vmatpush1.msra.mxu0 0.0
    %525 = vmatprep.subr.mxu0 0.0
    %526 = vmatpush1.msra.mxu0 0.0
    %527 = vmatprep.subr.mxu0 0.0
    %528 = vmatpush1.msra.mxu0 0.0
    %529 = vmatprep.subr.mxu0 0.0
    %530 = vmatpush1.msra.mxu0 0.0
    %531 = vmatprep.subr.mxu0 0.0
    %532 = vmatpush1.msra.mxu0 0.0
    %533 = vmatprep.subr.mxu0 0.0
    %534 = vmatpush1.msra.mxu0 0.0
    %535 = vmatprep.subr.mxu0 0.0
    %536 = vmatpush1.msra.mxu0 0.0
    %537 = vmatprep.subr.mxu0 0.0
    %538 = vmatpush1.msra.mxu0 0.0
    %539 = vmatprep.subr.mxu0 0.0
    %540 = vmatpush1.msra.mxu0 0.0
    %541 = vmatprep.subr.mxu0 0.0
    %542 = vmatpush1.msra.mxu0 0.0
    %543 = vmatprep.subr.mxu0 0.0
    %544 = vmatpush1.msra.mxu0 0.0
    %545 = vmatprep.subr.mxu0 0.0
    %546 = vmatpush1.msra.mxu0 0.0
    %547 = vmatprep.subr.mxu0 0.0
    %548 = vmatpush1.msra.mxu0 0.0
    %549 = vmatprep.subr.mxu0 0.0
    %550 = vmatpush1.msra.mxu0 0.0
    %551 = vmatprep.subr.mxu0 0.0
    %552 = vmatpush1.msra.mxu0 0.0
    %553 = vmatprep.subr.mxu0 0.0
    %554 = vmatpush1.msra.mxu0 0.0
    %555 = vmatprep.subr.mxu0 0.0
    %556 = vmatpush1.msra.mxu0 0.0
    %557 = vmatprep.subr.mxu0 0.0
    %558 = vmatpush1.msra.mxu0 0.0
    %559 = vmatprep.subr.mxu0 0.0
    %560 = vmatpush1.msra.mxu0 0.0
    %561 = vmatprep.subr.mxu0 0.0
    %562 = vmatpush1.msra.mxu0 0.0
    %563 = vmatprep.subr.mxu0 0.0
    %564 = vmatpush1.msra.mxu0 0.0
    %565 = vmatprep.mubr.f32.mxu0 0.0
    %566 = vmatmul.mubr.f32.gmra.mrb[0].mxu0 %v490
    %v567 = vpop.f32.mrb[0].mxu0
    %v568 = vadd.f32 0.0, %v567
    %v569 = vpop.f32.mrb[0].mxu0
    %570 = vmatprep.mubr.f32.mxu0 0.0
    %571 = vmatmul.mubr.f32.gmra.mrb[0].mxu0 %v493
    %v572 = vpop.f32.mrb[0].mxu0
    %v573 = vadd.f32 0.0, %v572
    %v574 = vpop.f32.mrb[0].mxu0
    %575 = vmatprep.mubr.f32.mxu0 0.0
    %576 = vmatmul.mubr.f32.gmra.mrb[0].mxu0 %v496
    %v577 = vpop.f32.mrb[0].mxu0
    %v578 = vadd.f32 0.0, %v577
    %v579 = vpop.f32.mrb[0].mxu0
    %580 = vmatprep.mubr.f32.mxu0 0.0
    %581 = vmatmul.mubr.f32.gmra.mrb[0].mxu0 %v499
    %v582 = vpop.f32.mrb[0].mxu0
    %v583 = vadd.f32 0.0, %v582
    %v584 = vpop.f32.mrb[0].mxu0
    %585 = vdwg.mxu0
    %v586 = vlaneseq
    %v587 = vand.u32 %v586, 127
    %vm588 = vcmp.lt.s32.totalorder %v587, 64
    %v589 = vmul.f32 %v372, %v568
    %v590 = vmul.f32 %v377, %v573
    %v591 = vmul.f32 %v382, %v578
    %v592 = vmul.f32 %v387, %v583
    %v593 = vmul.f32 %v372, 1.442695
    %v594 = vpow.pop %v593
    %v595 = vmul.f32 %v377, 1.442695
    %v596 = vpow.pop %v595
    %v597 = vmul.f32 %v382, 1.442695
    %v598 = vpow.pop %v597
    %v599 = vmul.f32 %v387, 1.442695
    %v600 = vpow.pop %v599
    %v601 = vadd.f32 %v594, 0.0
    %v602 = vadd.f32 %v596, 0.0
    %v603 = vadd.f32 %v598, 0.0
    %v604 = vadd.f32 %v600, 0.0
    %v605 = vsel %vm588, %v589, %v601
    %v606 = vsel %vm588, %v590, %v602
    %v607 = vsel %vm588, %v591, %v603
    %v608 = vsel %vm588, %v592, %v604
    %609 = vst [vmem:[#allocation5] sm:$0xff] %v605
    %610 = vst [vmem:[#allocation5 + $0x8] sm:$0xff] %v606
    %611 = vst [vmem:[#allocation5 + $0x10] sm:$0xff] %v607
    %612 = vst [vmem:[#allocation5 + $0x18] sm:$0xff] %v608
    // Predicated region
    $region38: #{tpu_custom_call.1} parent=1 // pred_check
      _
    $region39: #{tpu_custom_call.1} parent=1 // pred_check_branch
      %614 = sbr.rel (0) target = $region41
    $region40: #{tpu_custom_call.1} parent=1 // pred_region
      %s616 = ssub.s32 512, 512
      %617 = vsyncadd [#allocation4], %s616
      %s618 = sshll.u32 [#allocation5], 4
      %s619 = int_to_ptr.vmem [resolvable:$true] %s618
      %624 = dma.vmem_to_hbm [thread:$0]  %s619, 512, %s8, [#allocation4], 128, 128, 8
    $region41: #{tpu_custom_call.1} parent=1 // pred_fallthru
      _
    // Predicated region
    $region42: #{tpu_custom_call.1} parent=1 // pred_check
      _
    $region43: #{tpu_custom_call.1} parent=1 // pred_check_branch
      %626 = sbr.rel (0) target = $region45
    $region44: #{tpu_custom_call.1} parent=1 // pred_region
      %627 = dma.done [#allocation4], 512
    $region45: #{tpu_custom_call.1} parent=1 // pred_fallthru
      _
    %628 = vsyncpa [#allocation3], 1
    %629 = vsyncpa [#allocation4], 1

</llo_original>
